<compile_context>
chip_gen: v7x
topology: tpu7x:2x2x1
jax: 0.10.0
libtpu: 0.0.40
codegen_flags: <defaults>
</compile_context>

<pallas_src>
import functools

import jax
import jax.numpy as jnp
from jax.experimental import pallas as pl
from jax.experimental.pallas import tpu as pltpu

_LANE = 128
_SUBLANE = 8
# 2048 rows * 128 lanes * 4 B = 1 MiB per f32 input block.  With 3 inputs,
# double buffering, and the resident output block this stays well under the
# smallest default scoped-VMEM budget (v5e: 16 MiB).
_MAX_BLOCK_ROWS = 2048


# ---------------------------------------------------------------------------
# Kernels
# ---------------------------------------------------------------------------
def _l1_sum_kernel(block_rows, blocks_per_split, valid_rows,
                   pred_ref, target_ref, out_ref):
    """Accumulate |pred - target| elementwise into a per-split partial block."""
    c = pl.program_id(0)   # core split ("parallel")
    j = pl.program_id(1)   # block within split ("arbitrary")

    @pl.when(j == 0)
    def _():
        out_ref[...] = jnp.zeros_like(out_ref)

    diff = jnp.abs(pred_ref[...].astype(jnp.float32)
                   - target_ref[...].astype(jnp.float32))
    # Mask rows past the end of the slab (only the final partial block).
    row0 = (c * blocks_per_split + j) * block_rows
    row_ids = row0 + jax.lax.broadcasted_iota(jnp.int32, diff.shape, 0)
    diff = jnp.where(row_ids < valid_rows, diff, 0.0)
    out_ref[...] += diff   # pure VPU accumulation; VMEM-resident output block


def _l1_weighted_sum_kernel(block_rows, blocks_per_split, valid_rows,
                            pred_ref, target_ref, weight_ref, out_ref):
    """Accumulate |pred - target| * weight into a per-split partial block."""
    c = pl.program_id(0)
    j = pl.program_id(1)

    @pl.when(j == 0)
    def _():
        out_ref[...] = jnp.zeros_like(out_ref)

    diff = jnp.abs(pred_ref[...].astype(jnp.float32)
                   - target_ref[...].astype(jnp.float32))
    prod = diff * weight_ref[...].astype(jnp.float32)
    row0 = (c * blocks_per_split + j) * block_rows
    row_ids = row0 + jax.lax.broadcasted_iota(jnp.int32, prod.shape, 0)
    prod = jnp.where(row_ids < valid_rows, prod, 0.0)
    out_ref[...] += prod


def _l1_none_kernel(loss_weight, pred_ref, target_ref, out_ref):
    """Elementwise loss_weight * |pred - target| (reduction='none')."""
    diff = jnp.abs(pred_ref[...].astype(jnp.float32)
                   - target_ref[...].astype(jnp.float32))
    out_ref[...] = (loss_weight * diff).astype(out_ref.dtype)


def _l1_none_weighted_kernel(loss_weight, pred_ref, target_ref, weight_ref,
                             out_ref):
    """Elementwise loss_weight * |pred - target| * weight (reduction='none')."""
    diff = jnp.abs(pred_ref[...].astype(jnp.float32)
                   - target_ref[...].astype(jnp.float32))
    out_ref[...] = (loss_weight * diff
                    * weight_ref[...].astype(jnp.float32)).astype(out_ref.dtype)


# ---------------------------------------------------------------------------
# Wrappers
# ---------------------------------------------------------------------------
def _to_slab(x):
    """Flatten row-major and view as (rows, 128); pad (copy) only if needed."""
    flat = jnp.ravel(x)
    n = flat.shape[0]
    pad = (-n) % (_SUBLANE * _LANE)
    if pad:  # only copies when the size isn't already (8*128)-aligned
        flat = jnp.pad(flat, (0, pad))
    rows = flat.shape[0] // _LANE
    return flat.reshape(rows, _LANE), n


def _pallas_l1_sum(pred_slab, target_slab, weight_slab=None):
    rows = pred_slab.shape[0]
    block_rows = min(_MAX_BLOCK_ROWS, rows)
    total_blocks = pl.cdiv(rows, block_rows)
    # Leading "parallel" axis of size 2 for v7x's dual TensorCores (only when
    # the block count splits evenly, so no fully out-of-bounds block exists).
    num_splits = 2 if (total_blocks >= 2 and total_blocks % 2 == 0) else 1
    blocks_per_split = total_blocks // num_splits

    tile_spec = pl.BlockSpec((block_rows, _LANE),
                             lambda c, j: (c * blocks_per_split + j, 0))
    # Per-split partial-sum block stays resident in VMEM across the j axis.
    out_spec = pl.BlockSpec((block_rows, _LANE), lambda c, j: (c, 0))

    if weight_slab is None:
        kernel = functools.partial(_l1_sum_kernel,
                                   block_rows, blocks_per_split, rows)
        in_specs = [tile_spec, tile_spec]
        args = (pred_slab, target_slab)
    else:
        kernel = functools.partial(_l1_weighted_sum_kernel,
                                   block_rows, blocks_per_split, rows)
        in_specs = [tile_spec, tile_spec, tile_spec]
        args = (pred_slab, target_slab, weight_slab)

    partials = pl.pallas_call(
        kernel,
        out_shape=jax.ShapeDtypeStruct((num_splits * block_rows, _LANE),
                                       jnp.float32),
        grid_spec=pltpu.PrefetchScalarGridSpec(
            num_scalar_prefetch=0,
            grid=(num_splits, blocks_per_split),
            in_specs=in_specs,
            out_specs=out_spec,
        ),
        compiler_params=pltpu.CompilerParams(
            dimension_semantics=("parallel", "arbitrary")),
    )(*args)
    # Tiny (<= 2 MiB) final reduction of the per-core partial blocks.
    return jnp.sum(partials)


def _pallas_l1_none(pred_slab, target_slab, weight_slab, loss_weight,
                    out_dtype):
    rows = pred_slab.shape[0]
    block_rows = min(_MAX_BLOCK_ROWS, rows)
    total_blocks = pl.cdiv(rows, block_rows)
    tile_spec = pl.BlockSpec((block_rows, _LANE), lambda i: (i, 0))

    if weight_slab is None:
        kernel = functools.partial(_l1_none_kernel, float(loss_weight))
        in_specs = [tile_spec, tile_spec]
        args = (pred_slab, target_slab)
    else:
        kernel = functools.partial(_l1_none_weighted_kernel, float(loss_weight))
        in_specs = [tile_spec, tile_spec, tile_spec]
        args = (pred_slab, target_slab, weight_slab)

    return pl.pallas_call(
        kernel,
        out_shape=jax.ShapeDtypeStruct((rows, _LANE), out_dtype),
        grid_spec=pltpu.PrefetchScalarGridSpec(
            num_scalar_prefetch=0,
            grid=(total_blocks,),
            in_specs=in_specs,
            out_specs=tile_spec,
        ),
        compiler_params=pltpu.CompilerParams(
            dimension_semantics=("parallel",)),
    )(*args)


class L1Loss:
    """JAX/Pallas re-implementation of BEVFormer's L1Loss forward."""

    def __init__(self, reduction="mean", loss_weight=1.0, **kwargs):
        self.reduction = reduction
        self.loss_weight = float(loss_weight)

    def __call__(self, pred, target, weight=None, avg_factor=None,
                 reduction_override=None):
        assert reduction_override in (None, "none", "mean", "sum")
        reduction = reduction_override if reduction_override else self.reduction
        assert pred.shape == target.shape and pred.size > 0
        # NOTE: avg_factor is accepted but unused, exactly like the reference
        # PyTorch forward (it never touches avg_factor).

        pred_slab, numel = _to_slab(pred)
        target_slab, _ = _to_slab(target)
        weight_slab = None
        if weight is not None:
            weight_slab, _ = _to_slab(jnp.broadcast_to(weight, pred.shape))

        if reduction == "mean":
            total = _pallas_l1_sum(pred_slab, target_slab, weight_slab)
            return (self.loss_weight * total / numel).astype(jnp.float32)
        elif reduction == "none":
            loss_slab = _pallas_l1_none(pred_slab, target_slab, weight_slab,
                                        self.loss_weight, pred.dtype)
            if loss_slab.size == numel:   # no padding -> no slice copy
                return loss_slab.reshape(pred.shape)
            return loss_slab.reshape(-1)[:numel].reshape(pred.shape)
        else:
            # Matches the PyTorch forward: the 'sum' path raises.
            raise ValueError('avg_factor can not be used with reduction="sum"')


# ---------------------------------------------------------------------------
# Demo / self-check
# ---------------------------------------------------------------------------
if __name__ == "__main__":
    key = jax.random.PRNGKey(0)
    k1, k2, k3 = jax.random.split(key, 3)

    # Small NCHW-style prediction/target tensors (e.g. bbox regression maps).
    pred = jax.random.normal(k1, (2, 4, 16, 16), dtype=jnp.float32)
    target = jax.random.normal(k2, (2, 4, 16, 16), dtype=jnp.float32)
    weight = jax.random.uniform(k3, (2, 4, 16, 16), dtype=jnp.float32)

    loss_mod = L1Loss(reduction="mean", loss_weight=1.0)

    # mean reduction (default path)
    loss_mean = loss_mod(pred, target)
    jax.block_until_ready(loss_mean)
    ref_mean = jnp.mean(jnp.abs(pred - target))
    assert jnp.allclose(loss_mean, ref_mean, rtol=1e-5, atol=1e-5)

    # mean reduction with per-element weight (fused in kernel)
    loss_w = loss_mod(pred, target, weight=weight)
    jax.block_until_ready(loss_w)
    ref_w = jnp.mean(jnp.abs(pred - target) * weight)
    assert jnp.allclose(loss_w, ref_w, rtol=1e-5, atol=1e-5)

    # 'none' reduction
    loss_none = loss_mod(pred, target, reduction_override="none")
    jax.block_until_ready(loss_none)
    ref_none = jnp.abs(pred - target)
    assert loss_none.shape == pred.shape
    assert jnp.allclose(loss_none, ref_none, rtol=1e-5, atol=1e-5)

    # 'none' reduction with weight (fused in kernel)
    loss_none_w = loss_mod(pred, target, weight=weight,
                           reduction_override="none")
    jax.block_until_ready(loss_none_w)
    ref_none_w = jnp.abs(pred - target) * weight
    assert jnp.allclose(loss_none_w, ref_none_w, rtol=1e-5, atol=1e-5)

    # Larger, non-aligned shape: exercises padding, tail-row masking and the
    # 2-way "parallel" split of the reduction grid.
    k4, k5, k6 = jax.random.split(k3, 3)
    pred2 = jax.random.normal(k4, (2, 4, 183, 180), dtype=jnp.float32)
    target2 = jax.random.normal(k5, (2, 4, 183, 180), dtype=jnp.float32)
    weight2 = jax.random.uniform(k6, (2, 4, 183, 180), dtype=jnp.float32)

    loss2 = loss_mod(pred2, target2)
    jax.block_until_ready(loss2)
    ref2 = jnp.mean(jnp.abs(pred2 - target2))
    assert jnp.allclose(loss2, ref2, rtol=1e-5, atol=1e-5)

    loss2_w = loss_mod(pred2, target2, weight=weight2)
    jax.block_until_ready(loss2_w)
    ref2_w = jnp.mean(jnp.abs(pred2 - target2) * weight2)
    assert jnp.allclose(loss2_w, ref2_w, rtol=1e-5, atol=1e-5)

    print("KERNEL_OK")
</pallas_src>

<mosaic_0001>
module attributes {stable_mosaic.version = 11 : i64} {
  func.func @_l1_sum_kernel(%arg0: i32, %arg1: i32, %arg2: memref<16x128xf32, #tpu.memory_space<vmem>>, %arg3: memref<16x128xf32, #tpu.memory_space<vmem>>, %arg4: memref<16x128xf32, #tpu.memory_space<vmem>>) attributes {dimension_semantics = [#tpu.dimension_semantics<parallel>, #tpu.dimension_semantics<arbitrary>], iteration_bounds = array<i64: 1, 1>, scalar_prefetch = 0 : i64, scratch_operands = 0 : i64, tpu.core_type = #tpu.core_type<tc>, window_params = [{transform_indices = @transform_0, window_bounds = array<i64: 16, 128>}, {transform_indices = @transform_1, window_bounds = array<i64: 16, 128>}, {transform_indices = @transform_2, window_bounds = array<i64: 16, 128>}]} {
    %c0_i32 = arith.constant 0 : i32
    %0 = arith.cmpi eq, %arg1, %c0_i32 : i32
    %1 = arith.extui %0 : i1 to i32
    %c0_i32_0 = arith.constant 0 : i32
    %2 = arith.cmpi ne, %1, %c0_i32_0 : i32
    scf.if %2 {
      %cst_9 = arith.constant 0.000000e+00 : f32
      %20 = vector.broadcast %cst_9 : f32 to vector<16x128xf32>
      %c0_10 = arith.constant 0 : index
      %c0_11 = arith.constant 0 : index
      %21 = vector.load %arg4[%c0_10, %c0_11] : memref<16x128xf32, #tpu.memory_space<vmem>>, vector<16x128xf32>
      tpu.vector_store %arg4[%c0_10, %c0_11], %20 {strides = array<i32>} : memref<16x128xf32, #tpu.memory_space<vmem>>, vector<16x128xf32>,
    } else {
    }
    %c0 = arith.constant 0 : index
    %c0_1 = arith.constant 0 : index
    %3 = vector.load %arg2[%c0, %c0_1] : memref<16x128xf32, #tpu.memory_space<vmem>>, vector<16x128xf32>
    %c0_2 = arith.constant 0 : index
    %c0_3 = arith.constant 0 : index
    %4 = vector.load %arg3[%c0_2, %c0_3] : memref<16x128xf32, #tpu.memory_space<vmem>>, vector<16x128xf32>
    %5 = arith.subf %3, %4 : vector<16x128xf32>
    %6 = math.absf %5 : vector<16x128xf32>
    %c1_i32 = arith.constant 1 : i32
    %7 = arith.muli %arg0, %c1_i32 : i32
    %8 = arith.addi %7, %arg1 : i32
    %c16_i32 = arith.constant 16 : i32
    %9 = arith.muli %8, %c16_i32 : i32
    %10 = tpu.iota {dimensions = array<i32: 0>} : vector<16x128xi32>
    %11 = vector.broadcast %9 : i32 to vector<16x128xi32>
    %12 = arith.addi %11, %10 : vector<16x128xi32>
    %c16_i32_4 = arith.constant 16 : i32
    %13 = vector.broadcast %c16_i32_4 : i32 to vector<16x128xi32>
    %14 = arith.cmpi slt, %12, %13 : vector<16x128xi32>
    %cst = arith.constant 0.000000e+00 : f32
    %15 = vector.broadcast %cst : f32 to vector<16x128xf32>
    %16 = arith.select %14, %6, %15 : vector<16x128xi1>, vector<16x128xf32>
    %c0_5 = arith.constant 0 : index
    %c0_6 = arith.constant 0 : index
    %17 = vector.load %arg4[%c0_5, %c0_6] : memref<16x128xf32, #tpu.memory_space<vmem>>, vector<16x128xf32>
    %18 = arith.addf %17, %16 : vector<16x128xf32>
    %c0_7 = arith.constant 0 : index
    %c0_8 = arith.constant 0 : index
    %19 = vector.load %arg4[%c0_7, %c0_8] : memref<16x128xf32, #tpu.memory_space<vmem>>, vector<16x128xf32>
    tpu.vector_store %arg4[%c0_7, %c0_8], %18 {strides = array<i32>} : memref<16x128xf32, #tpu.memory_space<vmem>>, vector<16x128xf32>,
    return
  }
  func.func @transform_0(%arg0: i32, %arg1: i32) -> (i32, i32) {
    %c1_i32 = arith.constant 1 : i32
    %0 = arith.muli %arg0, %c1_i32 : i32
    %1 = arith.addi %0, %arg1 : i32
    %c0_i32 = arith.constant 0 : i32
    %c0_i32_0 = arith.constant 0 : i32
    return %1, %c0_i32 : i32, i32
  }
  func.func @transform_1(%arg0: i32, %arg1: i32) -> (i32, i32) {
    %c1_i32 = arith.constant 1 : i32
    %0 = arith.muli %arg0, %c1_i32 : i32
    %1 = arith.addi %0, %arg1 : i32
    %c0_i32 = arith.constant 0 : i32
    %c0_i32_0 = arith.constant 0 : i32
    return %1, %c0_i32 : i32, i32
  }
  func.func @transform_2(%arg0: i32, %arg1: i32) -> (i32, i32) {
    %c0_i32 = arith.constant 0 : i32
    %c0_i32_0 = arith.constant 0 : i32
    return %arg0, %c0_i32 : i32, i32
  }
}

</mosaic_0001>

<llo_original>
// kernel: tpu_custom_call.1
$region0: #{tpu_custom_call.1}
  #allocation0 [shape = 'u32[]', space=smem, size = 0x4, offset = 0x4, fixed_abs, tag = 'smem constant byte address 0x4 - core index']
  #allocation1 [shape = 'u32[144,128]{1,0:T(1,128)}', space=vmem, size = 0x12000, scoped, tag = 'internal scratch']
  %s0 = inlined_call_operand.hbm [shape: f32[16,128], index: 0, kind: input, shape index: {}]
  %s1 = inlined_call_operand.hbm [shape: f32[16,128], index: 1, kind: input, shape index: {}]
  %s2 = inlined_call_operand.hbm [shape: f32[16,128], index: 2, kind: output, shape index: {}]
  %s3 = sld [smem:[#allocation0]]
  $region30: #{tpu_custom_call.1} parent=0
    _
  %s5 = ssub.s32 1, %s3
  %s6 = scalar_select 0, %s5, %s3
  $region1: #{tpu_custom_call.1} parent=0
    #allocation2 [shape = 'u8[8192]{0}', space=vmem, size = 0x2000, scoped, tag = 'input window, operand 0, single buffered']
    #allocation3 [shape = 's32[1]{0}', space=sflag, size = 0x4, scoped, tag = 'scoped memory for tpu_custom_call.1']
    #allocation4 [shape = 's32[1]{0}', space=sflag, size = 0x4, scoped, tag = 'scoped memory for tpu_custom_call.1']
    #allocation5 [shape = 'u8[8192]{0}', space=vmem, size = 0x2000, scoped, tag = 'input window, operand 1, single buffered']
    #allocation6 [shape = 's32[1]{0}', space=sflag, size = 0x4, scoped, tag = 'scoped memory for tpu_custom_call.1']
    #allocation7 [shape = 'u8[8192]{0}', space=vmem, size = 0x2000, scoped, tag = 'output window, operand 0, single buffered']
    %7 = vsyncpa [#allocation3], 0
    %8 = vsyncpa [#allocation6], 0
    %9 = vsyncpa [#allocation4], 0
    // Predicated region
    $region2: #{tpu_custom_call.1} parent=1 // pred_check
      _
    $region3: #{tpu_custom_call.1} parent=1 // pred_check_branch
      %11 = sbr.rel (0) target = $region5
    $region4: #{tpu_custom_call.1} parent=1 // pred_region
      %s12 = sadd.s32 0, 0
      %s13 = smul.u32 2, %s12
      %s15 = ssub.s32 256, 256
      %16 = vsyncadd [#allocation3], %s15
      %s17 = smul.addr %s13, 128
      %s18 = scalar_lea.hbm %s0, %s17
      %s19 = sshll.u32 [#allocation2], 4
      %s20 = int_to_ptr.vmem [resolvable:$true] %s19
      %25 = dma.hbm_to_vmem [thread:$0]  %s18, 256, %s20, [#allocation3], 128, 128, 8
    $region5: #{tpu_custom_call.1} parent=1 // pred_fallthru
      _
    // Predicated region
    $region6: #{tpu_custom_call.1} parent=1 // pred_check
      _
    $region7: #{tpu_custom_call.1} parent=1 // pred_check_branch
      %27 = sbr.rel (0) target = $region9
    $region8: #{tpu_custom_call.1} parent=1 // pred_region
      %s28 = sadd.s32 0, 0
      %s29 = smul.u32 2, %s28
      %s31 = ssub.s32 256, 256
      %32 = vsyncadd [#allocation6], %s31
      %s33 = smul.addr %s29, 128
      %s34 = scalar_lea.hbm %s1, %s33
      %s35 = sshll.u32 [#allocation5], 4
      %s36 = int_to_ptr.vmem [resolvable:$true] %s35
      %41 = dma.hbm_to_vmem [thread:$0]  %s34, 256, %s36, [#allocation6], 128, 128, 8
    $region9: #{tpu_custom_call.1} parent=1 // pred_fallthru
      _
    // Predicated region
    $region10: #{tpu_custom_call.1} parent=1 // pred_check
      _
    $region11: #{tpu_custom_call.1} parent=1 // pred_check_branch
      %43 = sbr.rel (0) target = $region13
    $region12: #{tpu_custom_call.1} parent=1 // pred_region
      %44 = dma.done [#allocation3], 256
    $region13: #{tpu_custom_call.1} parent=1 // pred_fallthru
      _
    // Predicated region
    $region14: #{tpu_custom_call.1} parent=1 // pred_check
      _
    $region15: #{tpu_custom_call.1} parent=1 // pred_check_branch
      %46 = sbr.rel (0) target = $region17
    $region16: #{tpu_custom_call.1} parent=1 // pred_region
      %47 = dma.done [#allocation6], 256
    $region17: #{tpu_custom_call.1} parent=1 // pred_fallthru
      _
    %s48 = sadd.s32 0, 0
    %s49 = smul.u32 2, %s48
    %s50 = sadd.s32 0, 0
    %s51 = smul.u32 2, %s50
    %p52 = scmp.eq.s32.totalorder 0, 0
    // Predicated region
    $region18: #{tpu_custom_call.1} parent=1 // pred_check
      %p53 = pneg %p52
    $region19: #{tpu_custom_call.1} parent=1 // pred_check_branch
      %55 = sbr.rel (%p53) target = $region21
    $region20: #{tpu_custom_call.1} parent=1 // pred_region
      %56 = vst [vmem:[#allocation7] sm:$0xff] 0.0
      %57 = vst [vmem:[#allocation7 + $0x8] sm:$0xff] 0.0
    $region21: #{tpu_custom_call.1} parent=1 // pred_fallthru
      _
    %v58 = vld [vmem:[#allocation2] sm:$0xff]
    %v59 = vld [vmem:[#allocation2 + $0x8] sm:$0xff]
    %v60 = vld [vmem:[#allocation5] sm:$0xff]
    %v61 = vld [vmem:[#allocation5 + $0x8] sm:$0xff]
    %v62 = vsub.f32 %v58, %v60
    %v63 = vsub.f32 %v59, %v61
    %v64 = vand.u32 2147483647, %v62
    %v65 = vand.u32 2147483647, %v63
    %s66 = sadd.s32 0, 0
    %s67 = smul.u32 %s66, 16
    %v68 = vlaneseq
    %v69 = vshrl.u32 %v68, 7
    %v70 = vadd.s32 %v69, 8
    %v71 = vstv %s67
    %v72 = vadd.s32 %v71, %v69
    %v73 = vadd.s32 %v71, %v70
    %vm74 = vcmp.lt.s32.totalorder %v72, 16
    %vm75 = vcmp.lt.s32.totalorder %v73, 16
    %v76 = vsel %vm74, %v64, 0.0
    %v77 = vsel %vm75, %v65, 0.0
    %v78 = vld [vmem:[#allocation7] sm:$0xff]
    %v79 = vld [vmem:[#allocation7 + $0x8] sm:$0xff]
    %v80 = vadd.f32 %v78, %v76
    %v81 = vadd.f32 %v79, %v77
    %82 = vst [vmem:[#allocation7] sm:$0xff] %v80
    %83 = vst [vmem:[#allocation7 + $0x8] sm:$0xff] %v81
    // Predicated region
    $region22: #{tpu_custom_call.1} parent=1 // pred_check
      _
    $region23: #{tpu_custom_call.1} parent=1 // pred_check_branch
      %85 = sbr.rel (0) target = $region25
    $region24: #{tpu_custom_call.1} parent=1 // pred_region
      %s87 = ssub.s32 256, 256
      %88 = vsyncadd [#allocation4], %s87
      %s89 = sshll.u32 [#allocation7], 4
      %s90 = int_to_ptr.vmem [resolvable:$true] %s89
      %95 = dma.vmem_to_hbm [thread:$0]  %s90, 256, %s2, [#allocation4], 128, 128, 8
    $region25: #{tpu_custom_call.1} parent=1 // pred_fallthru
      _
    // Predicated region
    $region26: #{tpu_custom_call.1} parent=1 // pred_check
      _
    $region27: #{tpu_custom_call.1} parent=1 // pred_check_branch
      %97 = sbr.rel (0) target = $region29
    $region28: #{tpu_custom_call.1} parent=1 // pred_region
      %98 = dma.done [#allocation4], 256
    $region29: #{tpu_custom_call.1} parent=1 // pred_fallthru
      _
    %99 = vsyncpa [#allocation3], 1
    %100 = vsyncpa [#allocation6], 1
    %101 = vsyncpa [#allocation4], 1

</llo_original>
